<compile_context>
chip_gen: v7x
topology: tpu7x:2x2x1
jax: 0.10.0
libtpu: 0.0.40
codegen_flags: <defaults>
</compile_context>

<pallas_src>
import jax
import jax.numpy as jnp
from jax.experimental import pallas as pl
from jax.experimental.pallas import tpu as pltpu


def _round_up(x, m):
    return ((x + m - 1) // m) * m


def _fused_fasttext_kernel(idx_ref, m1_ref, b1_ref, w2_ref, b2_ref, o_ref):
    # idx_ref: (TB, K, 1) int32 — K = nb_keys * S flattened hash ids per example,
    #          trailing size-1 axis so the compare below is a cheap lane splat.
    # m1_ref : (NR_PAD, H_PAD) f32 — (emb/S) @ W1, rows >= nr_hash are zero.
    tb, k, _ = idx_ref.shape
    nr_pad = m1_ref.shape[0]

    idx = idx_ref[...]                                                    # (TB, K, 1) i32
    hash_ids = jax.lax.broadcasted_iota(jnp.int32, (tb, k, nr_pad), 2)    # (TB, K, NR_PAD)

    # One-hot compare (lane-splat of the size-1 trailing axis) + sublane reduce.
    # Duplicates accumulate, matching sum-of-embeddings semantics exactly.
    # Hash ids >= nr_hash hit zero rows of M1 (contribute 0); ids >= nr_pad match
    # no lane and are silently dropped (hashed-input contract).
    onehot = (idx == hash_ids).astype(jnp.float32)                        # (TB, K, NR_PAD)
    counts = jnp.sum(onehot, axis=1)                                      # (TB, NR_PAD)

    # sum(embedding(key)).mean(dim=1) @ W1  ==  counts @ ((emb / S) @ W1)
    h = jnp.dot(counts, m1_ref[...],
                preferred_element_type=jnp.float32) + b1_ref[...]         # (TB, H_PAD)
    h = jnp.maximum(h, 0.0)

    out = jnp.dot(h, w2_ref[...],
                  preferred_element_type=jnp.float32) + b2_ref[...]       # (TB, C_PAD)
    o_ref[...] = out.astype(o_ref.dtype)                                  # lane-dense store


def pad_and_fold_params(emb_table, w1, b1, w2, b2, *, seq_len):
    """One-time host-side prep: pad lane dims to 128 and fold (1/S) * emb @ W1.

    Weights are expected as torch fc.weight.T, i.e. (in_features, out_features).
    """
    nr_hash, embed_dim = emb_table.shape
    hidden = w1.shape[1]
    num_classes = w2.shape[1]
    nr_pad = _round_up(nr_hash, 128)
    h_pad = _round_up(hidden, 128)
    c_pad = _round_up(num_classes, 128)

    emb_pad = jnp.zeros((nr_pad, embed_dim), jnp.float32).at[:nr_hash, :].set(
        emb_table.astype(jnp.float32))
    # Exact (full f32) fold of the mean and fc1 into the embedding table.
    m1 = jnp.dot(emb_pad * (1.0 / float(seq_len)), w1.astype(jnp.float32),
                 precision=jax.lax.Precision.HIGHEST)                  # (NR_PAD, hidden)
    m1_pad = jnp.zeros((nr_pad, h_pad), jnp.float32).at[:, :hidden].set(m1)
    b1_pad = jnp.zeros((1, h_pad), jnp.float32).at[0, :hidden].set(b1.astype(jnp.float32))
    w2_pad = jnp.zeros((h_pad, c_pad), jnp.float32).at[:hidden, :num_classes].set(
        w2.astype(jnp.float32))
    b2_pad = jnp.zeros((1, c_pad), jnp.float32).at[0, :num_classes].set(
        b2.astype(jnp.float32))
    return m1_pad, b1_pad, w2_pad, b2_pad


def fasttext_forward(idx_flat, m1_pad, b1_pad, w2_pad, b2_pad, *, num_classes,
                     block_b=None):
    """idx_flat: (B, nb_keys*S) int32 hash indices. Returns (B, num_classes) f32."""
    B, K = idx_flat.shape
    nr_pad, h_pad = m1_pad.shape
    c_pad = w2_pad.shape[1]

    if block_b is None:
        # Fill the MXU per step (256 rows on v6e/v7x) and, when B is large, give
        # v7x a >=2-step batch-parallel grid to use both TensorCores.
        tb = B
        for cand in (256, 128):
            if B > cand and B % cand == 0:
                tb = cand
                break
    else:
        tb = block_b
    assert B % tb == 0, "batch must be a multiple of the batch tile"
    assert tb % 8 == 0, "batch tile must be a multiple of 8 (f32 sublane tile)"
    grid = (B // tb,)

    # Trailing size-1 axis so the in-kernel compare is a lane splat (no reshape
    # / lane-extract inside the kernel).
    idx3 = idx_flat.astype(jnp.int32).reshape(B, K, 1)

    # Explicit VMEM budget: resident M1 + W2 + biases, double-buffered idx/out
    # tiles, the (tb, K, nr_pad) one-hot intermediate and the counts tile.
    est_bytes = 4 * (nr_pad * h_pad + h_pad * c_pad + h_pad + c_pad
                     + 2 * tb * K + 2 * tb * c_pad
                     + tb * K * nr_pad + tb * nr_pad)
    vmem_limit = int(min(64 * 1024 * 1024, max(2 * est_bytes, 8 * 1024 * 1024)))

    out_pad = pl.pallas_call(
        _fused_fasttext_kernel,
        out_shape=jax.ShapeDtypeStruct((B, c_pad), jnp.float32),
        grid=grid,
        in_specs=[
            pl.BlockSpec((tb, K, 1), lambda i: (i, 0, 0)),   # hash ids (batch-tiled)
            pl.BlockSpec((nr_pad, h_pad), lambda i: (0, 0)), # folded (emb/S)@W1 (resident)
            pl.BlockSpec((1, h_pad), lambda i: (0, 0)),      # fc1 bias
            pl.BlockSpec((h_pad, c_pad), lambda i: (0, 0)),  # fc2 weight.T (padded)
            pl.BlockSpec((1, c_pad), lambda i: (0, 0)),      # fc2 bias
        ],
        out_specs=pl.BlockSpec((tb, c_pad), lambda i: (i, 0)),
        compiler_params=pltpu.CompilerParams(
            dimension_semantics=("parallel",),
            vmem_limit_bytes=vmem_limit),
    )(idx3, m1_pad, b1_pad, w2_pad, b2_pad)

    # Keep the kernel store lane-dense (c_pad=128); slice to num_classes here.
    # Downstream consumers that tolerate the padded (B, 128) result can skip this.
    return out_pad[:, :num_classes]


def model_forward(keys, emb_table, w1, b1, w2, b2, *, padded_params=None,
                  block_b=None):
    """keys: list of nb_keys int32 arrays of shape (B, S) (matches the torch API)."""
    B, S = keys[0].shape
    num_classes = w2.shape[1]
    if padded_params is None:
        padded_params = pad_and_fold_params(emb_table, w1, b1, w2, b2, seq_len=S)
    # Flatten the nb_keys index tensors into one (B, nb_keys*S) array — the only
    # glue op outside the kernel; gather/sum/mean/MLP all happen inside.
    idx_flat = jnp.concatenate([k.astype(jnp.int32) for k in keys], axis=1)
    return fasttext_forward(idx_flat, *padded_params, num_classes=num_classes,
                            block_b=block_b)


if __name__ == "__main__":
    # Config (small, consistent with the module):
    nr_hash = 100      # config.nr_hash
    embed_dim = 32     # config.embed_dim
    hidden_size = 64   # config.hidden_size
    num_classes = 8    # config.num_classes
    nb_keys = 3        # config.nb_keys
    batch, seq = 8, 8

    key = jax.random.PRNGKey(0)
    k_emb, k_w1, k_b1, k_w2, k_b2, k_idx = jax.random.split(key, 6)

    # Deterministic synthetic parameters.
    emb_table = jax.random.normal(k_emb, (nr_hash, embed_dim), jnp.float32) * 0.1
    w1 = jax.random.normal(k_w1, (embed_dim, hidden_size), jnp.float32) * 0.1   # fc1.weight.T
    b1 = jax.random.normal(k_b1, (hidden_size,), jnp.float32) * 0.1             # fc1.bias
    w2 = jax.random.normal(k_w2, (hidden_size, num_classes), jnp.float32) * 0.1 # fc2.weight.T
    b2 = jax.random.normal(k_b2, (num_classes,), jnp.float32) * 0.1             # fc2.bias

    # Inputs: list of nb_keys integer hash-index tensors, each (batch, seq).
    idx_keys = list(jax.random.randint(k_idx, (nb_keys, batch, seq), 0, nr_hash, jnp.int32))

    padded = pad_and_fold_params(emb_table, w1, b1, w2, b2, seq_len=seq)  # one-time prep
    out = model_forward(idx_keys, emb_table, w1, b1, w2, b2, padded_params=padded)
    out = jax.block_until_ready(out)

    # Reference check in plain JAX (same math as the PyTorch module).
    summed = sum(jnp.take(emb_table, k, axis=0) for k in idx_keys)
    pooled = summed.mean(axis=1)
    ref = jnp.maximum(pooled @ w1 + b1, 0.0) @ w2 + b2

    assert out.shape == (batch, num_classes)
    # Slightly relaxed atol vs 1e-5: the host-side (emb/S)@W1 fold reorders the
    # f32 contraction (exact math, different rounding order).
    assert jnp.allclose(out, ref, atol=2e-5, rtol=1e-4), "mismatch vs JAX reference"

    print("KERNEL_OK")
</pallas_src>

<mosaic_0001>
module attributes {stable_mosaic.version = 11 : i64} {
  func.func @_fused_fasttext_kernel(%arg0: i32, %arg1: memref<8x24x1xi32, #tpu.memory_space<vmem>>, %arg2: memref<128x128xf32, #tpu.memory_space<vmem>>, %arg3: memref<1x128xf32, #tpu.memory_space<vmem>>, %arg4: memref<128x128xf32, #tpu.memory_space<vmem>>, %arg5: memref<1x128xf32, #tpu.memory_space<vmem>>, %arg6: memref<8x128xf32, #tpu.memory_space<vmem>>) attributes {dimension_semantics = [#tpu.dimension_semantics<parallel>], iteration_bounds = array<i64: 1>, scalar_prefetch = 0 : i64, scratch_operands = 0 : i64, tpu.core_type = #tpu.core_type<tc>, window_params = [{transform_indices = @transform_0, window_bounds = array<i64: 8, 24, 1>}, {pipeline_mode = #tpu.pipeline_mode<synchronous>, transform_indices = @transform_1, window_bounds = array<i64: 128, 128>}, {pipeline_mode = #tpu.pipeline_mode<synchronous>, transform_indices = @transform_2, window_bounds = array<i64: 1, 128>}, {pipeline_mode = #tpu.pipeline_mode<synchronous>, transform_indices = @transform_3, window_bounds = array<i64: 128, 128>}, {pipeline_mode = #tpu.pipeline_mode<synchronous>, transform_indices = @transform_4, window_bounds = array<i64: 1, 128>}, {transform_indices = @transform_5, window_bounds = array<i64: 8, 128>}]} {
    %c0 = arith.constant 0 : index
    %c0_0 = arith.constant 0 : index
    %c0_1 = arith.constant 0 : index
    %0 = vector.load %arg1[%c0, %c0_0, %c0_1] : memref<8x24x1xi32, #tpu.memory_space<vmem>>, vector<8x24x1xi32>
    %1 = tpu.iota {dimensions = array<i32: 2>} : vector<8x24x128xi32>
    %2 = vector.broadcast %0 : vector<8x24x1xi32> to vector<8x24x128xi32>
    %3 = arith.cmpi eq, %2, %1 : vector<8x24x128xi32>
    %4 = arith.extui %3 : vector<8x24x128xi1> to vector<8x24x128xi32>
    %5 = arith.sitofp %4 : vector<8x24x128xi32> to vector<8x24x128xf32>
    %cst = arith.constant dense<0.000000e+00> : vector<8x128xf32>
    %6 = vector.multi_reduction <add>, %5, %cst [1] : vector<8x24x128xf32> to vector<8x128xf32>
    %c0_2 = arith.constant 0 : index
    %c0_3 = arith.constant 0 : index
    %7 = vector.load %arg2[%c0_2, %c0_3] : memref<128x128xf32, #tpu.memory_space<vmem>>, vector<128x128xf32>
    %cst_4 = arith.constant dense<0.000000e+00> : vector<8x128xf32>
    %8 = tpu.matmul %6, %7, %cst_4 {dimension_numbers = #tpu.dot_dimension_numbers<[1], [0], [0], [1], [0, 0, 1, 1], [], []>} : vector<8x128xf32>, vector<128x128xf32>, vector<8x128xf32> -> vector<8x128xf32>
    %c0_5 = arith.constant 0 : index
    %c0_6 = arith.constant 0 : index
    %9 = vector.load %arg3[%c0_5, %c0_6] : memref<1x128xf32, #tpu.memory_space<vmem>>, vector<1x128xf32>
    %10 = vector.broadcast %9 : vector<1x128xf32> to vector<8x128xf32>
    %11 = arith.addf %8, %10 : vector<8x128xf32>
    %cst_7 = arith.constant 0.000000e+00 : f32
    %12 = vector.broadcast %cst_7 : f32 to vector<8x128xf32>
    %13 = arith.maximumf %11, %12 : vector<8x128xf32>
    %c0_8 = arith.constant 0 : index
    %c0_9 = arith.constant 0 : index
    %14 = vector.load %arg4[%c0_8, %c0_9] : memref<128x128xf32, #tpu.memory_space<vmem>>, vector<128x128xf32>
    %cst_10 = arith.constant dense<0.000000e+00> : vector<8x128xf32>
    %15 = tpu.matmul %13, %14, %cst_10 {dimension_numbers = #tpu.dot_dimension_numbers<[1], [0], [0], [1], [0, 0, 1, 1], [], []>} : vector<8x128xf32>, vector<128x128xf32>, vector<8x128xf32> -> vector<8x128xf32>
    %c0_11 = arith.constant 0 : index
    %c0_12 = arith.constant 0 : index
    %16 = vector.load %arg5[%c0_11, %c0_12] : memref<1x128xf32, #tpu.memory_space<vmem>>, vector<1x128xf32>
    %17 = vector.broadcast %16 : vector<1x128xf32> to vector<8x128xf32>
    %18 = arith.addf %15, %17 : vector<8x128xf32>
    %c0_13 = arith.constant 0 : index
    %c0_14 = arith.constant 0 : index
    %19 = vector.load %arg6[%c0_13, %c0_14] : memref<8x128xf32, #tpu.memory_space<vmem>>, vector<8x128xf32>
    tpu.vector_store %arg6[%c0_13, %c0_14], %18 {strides = array<i32>} : memref<8x128xf32, #tpu.memory_space<vmem>>, vector<8x128xf32>,
    return
  }
  func.func @transform_0(%arg0: i32) -> (i32, i32, i32) {
    %c0_i32 = arith.constant 0 : i32
    %c0_i32_0 = arith.constant 0 : i32
    %c0_i32_1 = arith.constant 0 : i32
    return %arg0, %c0_i32, %c0_i32_0 : i32, i32, i32
  }
  func.func @transform_1(%arg0: i32) -> (i32, i32) {
    %c0_i32 = arith.constant 0 : i32
    %c0_i32_0 = arith.constant 0 : i32
    %c0_i32_1 = arith.constant 0 : i32
    return %c0_i32, %c0_i32_0 : i32, i32
  }
  func.func @transform_2(%arg0: i32) -> (i32, i32) {
    %c0_i32 = arith.constant 0 : i32
    %c0_i32_0 = arith.constant 0 : i32
    %c0_i32_1 = arith.constant 0 : i32
    return %c0_i32, %c0_i32_0 : i32, i32
  }
  func.func @transform_3(%arg0: i32) -> (i32, i32) {
    %c0_i32 = arith.constant 0 : i32
    %c0_i32_0 = arith.constant 0 : i32
    %c0_i32_1 = arith.constant 0 : i32
    return %c0_i32, %c0_i32_0 : i32, i32
  }
  func.func @transform_4(%arg0: i32) -> (i32, i32) {
    %c0_i32 = arith.constant 0 : i32
    %c0_i32_0 = arith.constant 0 : i32
    %c0_i32_1 = arith.constant 0 : i32
    return %c0_i32, %c0_i32_0 : i32, i32
  }
  func.func @transform_5(%arg0: i32) -> (i32, i32) {
    %c0_i32 = arith.constant 0 : i32
    %c0_i32_0 = arith.constant 0 : i32
    return %arg0, %c0_i32 : i32, i32
  }
}

</mosaic_0001>

<llo_original>
// kernel: tpu_custom_call.1
$region0: #{tpu_custom_call.1}
  #allocation0 [shape = 'u32[]', space=smem, size = 0x4, offset = 0x4, fixed_abs, tag = 'smem constant byte address 0x4 - core index']
  #allocation1 [shape = 'u32[144,128]{1,0:T(1,128)}', space=vmem, size = 0x12000, scoped, tag = 'internal scratch']
  %s0 = inlined_call_operand.vmem [shape: s32[8,24,1], index: 0, kind: input, shape index: {}]
  %s1 = inlined_call_operand.vmem [shape: f32[128,128], index: 1, kind: input, shape index: {}]
  %s2 = inlined_call_operand.vmem [shape: f32[1,128], index: 2, kind: input, shape index: {}]
  %s3 = inlined_call_operand.hbm [shape: f32[128,128], index: 3, kind: input, shape index: {}]
  %s4 = inlined_call_operand.vmem [shape: f32[1,128], index: 4, kind: input, shape index: {}]
  %s5 = inlined_call_operand.hbm [shape: f32[8,128], index: 5, kind: output, shape index: {}]
  %s6 = sld [smem:[#allocation0]]
  $region34: #{tpu_custom_call.1} parent=0
    _
  %s8 = ssub.s32 1, %s6
  %s9 = scalar_select 0, %s8, %s6
  $region1: #{tpu_custom_call.1} parent=0
    #allocation2 [shape = 'u8[65536]{0}', space=vmem, size = 0x10000, scoped, tag = 'input window, operand 3, single buffered']
    #allocation3 [shape = 's32[1]{0}', space=sflag, size = 0x4, scoped, tag = 'scoped memory for tpu_custom_call.1']
    #allocation4 [shape = 's32[1]{0}', space=sflag, size = 0x4, scoped, tag = 'scoped memory for tpu_custom_call.1']
    #allocation5 [shape = 'u8[4096]{0}', space=vmem, size = 0x1000, scoped, tag = 'output window, operand 0, single buffered']
    %10 = vsyncpa [#allocation3], 0
    %11 = vsyncpa [#allocation4], 0
    // Predicated region
    $region2: #{tpu_custom_call.1} parent=1 // pred_check
      _
    $region3: #{tpu_custom_call.1} parent=1 // pred_check_branch
      %13 = sbr.rel (0) target = $region5
    $region4: #{tpu_custom_call.1} parent=1 // pred_region
      _
    $region5: #{tpu_custom_call.1} parent=1 // pred_fallthru
      _
    // Predicated region
    $region6: #{tpu_custom_call.1} parent=1 // pred_check
      _
    $region7: #{tpu_custom_call.1} parent=1 // pred_check_branch
      %15 = sbr.rel (0) target = $region9
    $region8: #{tpu_custom_call.1} parent=1 // pred_region
      _
    $region9: #{tpu_custom_call.1} parent=1 // pred_fallthru
      _
    // Predicated region
    $region10: #{tpu_custom_call.1} parent=1 // pred_check
      _
    $region11: #{tpu_custom_call.1} parent=1 // pred_check_branch
      %17 = sbr.rel (0) target = $region13
    $region12: #{tpu_custom_call.1} parent=1 // pred_region
      _
    $region13: #{tpu_custom_call.1} parent=1 // pred_fallthru
      _
    // Predicated region
    $region14: #{tpu_custom_call.1} parent=1 // pred_check
      _
    $region15: #{tpu_custom_call.1} parent=1 // pred_check_branch
      %19 = sbr.rel (0) target = $region17
    $region16: #{tpu_custom_call.1} parent=1 // pred_region
      %s21 = ssub.s32 2048, 2048
      %22 = vsyncadd [#allocation3], %s21
      %s23 = sshll.u32 [#allocation2], 4
      %s24 = int_to_ptr.vmem [resolvable:$true] %s23
      %29 = dma.hbm_to_vmem [thread:$0]  %s3, 2048, %s24, [#allocation3], 128, 128, 8
    $region17: #{tpu_custom_call.1} parent=1 // pred_fallthru
      _
    // Predicated region
    $region18: #{tpu_custom_call.1} parent=1 // pred_check
      _
    $region19: #{tpu_custom_call.1} parent=1 // pred_check_branch
      %31 = sbr.rel (0) target = $region21
    $region20: #{tpu_custom_call.1} parent=1 // pred_region
      _
    $region21: #{tpu_custom_call.1} parent=1 // pred_fallthru
      _
    // Predicated region
    $region22: #{tpu_custom_call.1} parent=1 // pred_check
      _
    $region23: #{tpu_custom_call.1} parent=1 // pred_check_branch
      %33 = sbr.rel (0) target = $region25
    $region24: #{tpu_custom_call.1} parent=1 // pred_region
      %34 = dma.done [#allocation3], 2048
    $region25: #{tpu_custom_call.1} parent=1 // pred_fallthru
      _
    %v35 = vld [vmem:[%s0] sm:$0xff]
    %v36 = vld [vmem:[%s0 + $0x8] sm:$0xff]
    %v37 = vld [vmem:[%s0 + $0x10] sm:$0xff]
    %v38 = vld [vmem:[%s0 + $0x18] sm:$0xff]
    %v39 = vld [vmem:[%s0 + $0x20] sm:$0xff]
    %v40 = vld [vmem:[%s0 + $0x28] sm:$0xff]
    %v41 = vld [vmem:[%s0 + $0x30] sm:$0xff]
    %v42 = vld [vmem:[%s0 + $0x38] sm:$0xff]
    %v43 = vld [vmem:[%s0 + $0x40] sm:$0xff]
    %v44 = vld [vmem:[%s0 + $0x48] sm:$0xff]
    %v45 = vld [vmem:[%s0 + $0x50] sm:$0xff]
    %v46 = vld [vmem:[%s0 + $0x58] sm:$0xff]
    %v47 = vld [vmem:[%s0 + $0x60] sm:$0xff]
    %v48 = vld [vmem:[%s0 + $0x68] sm:$0xff]
    %v49 = vld [vmem:[%s0 + $0x70] sm:$0xff]
    %v50 = vld [vmem:[%s0 + $0x78] sm:$0xff]
    %v51 = vld [vmem:[%s0 + $0x80] sm:$0xff]
    %v52 = vld [vmem:[%s0 + $0x88] sm:$0xff]
    %v53 = vld [vmem:[%s0 + $0x90] sm:$0xff]
    %v54 = vld [vmem:[%s0 + $0x98] sm:$0xff]
    %v55 = vld [vmem:[%s0 + $0xa0] sm:$0xff]
    %v56 = vld [vmem:[%s0 + $0xa8] sm:$0xff]
    %v57 = vld [vmem:[%s0 + $0xb0] sm:$0xff]
    %v58 = vld [vmem:[%s0 + $0xb8] sm:$0xff]
    %v59 = vlaneseq
    %v60 = vand.u32 %v59, 127
    %61 = vset.pattern.permute.xlu0 0
    %62 = vperm.xlu0 %61, %v35
    %v63 = vpop.permute.xlu0 %62
    %64 = vset.pattern.permute.xlu0 0
    %65 = vperm.xlu0 %64, %v36
    %v66 = vpop.permute.xlu0 %65
    %67 = vset.pattern.permute.xlu0 0
    %68 = vperm.xlu0 %67, %v37
    %v69 = vpop.permute.xlu0 %68
    %70 = vset.pattern.permute.xlu0 0
    %71 = vperm.xlu0 %70, %v38
    %v72 = vpop.permute.xlu0 %71
    %73 = vset.pattern.permute.xlu0 0
    %74 = vperm.xlu0 %73, %v39
    %v75 = vpop.permute.xlu0 %74
    %76 = vset.pattern.permute.xlu0 0
    %77 = vperm.xlu0 %76, %v40
    %v78 = vpop.permute.xlu0 %77
    %79 = vset.pattern.permute.xlu0 0
    %80 = vperm.xlu0 %79, %v41
    %v81 = vpop.permute.xlu0 %80
    %82 = vset.pattern.permute.xlu0 0
    %83 = vperm.xlu0 %82, %v42
    %v84 = vpop.permute.xlu0 %83
    %85 = vset.pattern.permute.xlu0 0
    %86 = vperm.xlu0 %85, %v43
    %v87 = vpop.permute.xlu0 %86
    %88 = vset.pattern.permute.xlu0 0
    %89 = vperm.xlu0 %88, %v44
    %v90 = vpop.permute.xlu0 %89
    %91 = vset.pattern.permute.xlu0 0
    %92 = vperm.xlu0 %91, %v45
    %v93 = vpop.permute.xlu0 %92
    %94 = vset.pattern.permute.xlu0 0
    %95 = vperm.xlu0 %94, %v46
    %v96 = vpop.permute.xlu0 %95
    %97 = vset.pattern.permute.xlu0 0
    %98 = vperm.xlu0 %97, %v47
    %v99 = vpop.permute.xlu0 %98
    %100 = vset.pattern.permute.xlu0 0
    %101 = vperm.xlu0 %100, %v48
    %v102 = vpop.permute.xlu0 %101
    %103 = vset.pattern.permute.xlu0 0
    %104 = vperm.xlu0 %103, %v49
    %v105 = vpop.permute.xlu0 %104
    %106 = vset.pattern.permute.xlu0 0
    %107 = vperm.xlu0 %106, %v50
    %v108 = vpop.permute.xlu0 %107
    %109 = vset.pattern.permute.xlu0 0
    %110 = vperm.xlu0 %109, %v51
    %v111 = vpop.permute.xlu0 %110
    %112 = vset.pattern.permute.xlu0 0
    %113 = vperm.xlu0 %112, %v52
    %v114 = vpop.permute.xlu0 %113
    %115 = vset.pattern.permute.xlu0 0
    %116 = vperm.xlu0 %115, %v53
    %v117 = vpop.permute.xlu0 %116
    %118 = vset.pattern.permute.xlu0 0
    %119 = vperm.xlu0 %118, %v54
    %v120 = vpop.permute.xlu0 %119
    %121 = vset.pattern.permute.xlu0 0
    %122 = vperm.xlu0 %121, %v55
    %v123 = vpop.permute.xlu0 %122
    %124 = vset.pattern.permute.xlu0 0
    %125 = vperm.xlu0 %124, %v56
    %v126 = vpop.permute.xlu0 %125
    %127 = vset.pattern.permute.xlu0 0
    %128 = vperm.xlu0 %127, %v57
    %v129 = vpop.permute.xlu0 %128
    %130 = vset.pattern.permute.xlu0 0
    %131 = vperm.xlu0 %130, %v58
    %v132 = vpop.permute.xlu0 %131
    %vm133 = vcmp.eq.s32.totalorder %v63, %v60
    %vm134 = vcmp.eq.s32.totalorder %v66, %v60
    %vm135 = vcmp.eq.s32.totalorder %v69, %v60
    %vm136 = vcmp.eq.s32.totalorder %v72, %v60
    %vm137 = vcmp.eq.s32.totalorder %v75, %v60
    %vm138 = vcmp.eq.s32.totalorder %v78, %v60
    %vm139 = vcmp.eq.s32.totalorder %v81, %v60
    %vm140 = vcmp.eq.s32.totalorder %v84, %v60
    %vm141 = vcmp.eq.s32.totalorder %v87, %v60
    %vm142 = vcmp.eq.s32.totalorder %v90, %v60
    %vm143 = vcmp.eq.s32.totalorder %v93, %v60
    %vm144 = vcmp.eq.s32.totalorder %v96, %v60
    %vm145 = vcmp.eq.s32.totalorder %v99, %v60
    %vm146 = vcmp.eq.s32.totalorder %v102, %v60
    %vm147 = vcmp.eq.s32.totalorder %v105, %v60
    %vm148 = vcmp.eq.s32.totalorder %v108, %v60
    %vm149 = vcmp.eq.s32.totalorder %v111, %v60
    %vm150 = vcmp.eq.s32.totalorder %v114, %v60
    %vm151 = vcmp.eq.s32.totalorder %v117, %v60
    %vm152 = vcmp.eq.s32.totalorder %v120, %v60
    %vm153 = vcmp.eq.s32.totalorder %v123, %v60
    %vm154 = vcmp.eq.s32.totalorder %v126, %v60
    %vm155 = vcmp.eq.s32.totalorder %v129, %v60
    %vm156 = vcmp.eq.s32.totalorder %v132, %v60
    %v157 = vsel %vm133, 1, 0
    %v158 = vsel %vm134, 1, 0
    %v159 = vsel %vm135, 1, 0
    %v160 = vsel %vm136, 1, 0
    %v161 = vsel %vm137, 1, 0
    %v162 = vsel %vm138, 1, 0
    %v163 = vsel %vm139, 1, 0
    %v164 = vsel %vm140, 1, 0
    %v165 = vsel %vm141, 1, 0
    %v166 = vsel %vm142, 1, 0
    %v167 = vsel %vm143, 1, 0
    %v168 = vsel %vm144, 1, 0
    %v169 = vsel %vm145, 1, 0
    %v170 = vsel %vm146, 1, 0
    %v171 = vsel %vm147, 1, 0
    %v172 = vsel %vm148, 1, 0
    %v173 = vsel %vm149, 1, 0
    %v174 = vsel %vm150, 1, 0
    %v175 = vsel %vm151, 1, 0
    %v176 = vsel %vm152, 1, 0
    %v177 = vsel %vm153, 1, 0
    %v178 = vsel %vm154, 1, 0
    %v179 = vsel %vm155, 1, 0
    %v180 = vsel %vm156, 1, 0
    %v181 = vcvt.s32.f32 %v157
    %v182 = vcvt.s32.f32 %v158
    %v183 = vcvt.s32.f32 %v159
    %v184 = vcvt.s32.f32 %v160
    %v185 = vcvt.s32.f32 %v161
    %v186 = vcvt.s32.f32 %v162
    %v187 = vcvt.s32.f32 %v163
    %v188 = vcvt.s32.f32 %v164
    %v189 = vcvt.s32.f32 %v165
    %v190 = vcvt.s32.f32 %v166
    %v191 = vcvt.s32.f32 %v167
    %v192 = vcvt.s32.f32 %v168
    %v193 = vcvt.s32.f32 %v169
    %v194 = vcvt.s32.f32 %v170
    %v195 = vcvt.s32.f32 %v171
    %v196 = vcvt.s32.f32 %v172
    %v197 = vcvt.s32.f32 %v173
    %v198 = vcvt.s32.f32 %v174
    %v199 = vcvt.s32.f32 %v175
    %v200 = vcvt.s32.f32 %v176
    %v201 = vcvt.s32.f32 %v177
    %v202 = vcvt.s32.f32 %v178
    %v203 = vcvt.s32.f32 %v179
    %v204 = vcvt.s32.f32 %v180
    %v205 = vadd.f32 %v181, %v182
    %v206 = vadd.f32 %v205, %v183
    %v207 = vrot.slane %v206, 4
    %v208 = vadd.f32 %v206, %v207
    %v209 = vrot.slane %v208, 2
    %v210 = vadd.f32 %v208, %v209
    %v211 = vrot.slane %v210, 1
    %v212 = vadd.f32 %v210, %v211
    %v213 = vadd.f32 %v184, %v185
    %v214 = vadd.f32 %v213, %v186
    %v215 = vrot.slane %v214, 4
    %v216 = vadd.f32 %v214, %v215
    %v217 = vrot.slane %v216, 2
    %v218 = vadd.f32 %v216, %v217
    %v219 = vrot.slane %v218, 1
    %v220 = vadd.f32 %v218, %v219
    %v221 = vadd.f32 %v187, %v188
    %v222 = vadd.f32 %v221, %v189
    %v223 = vrot.slane %v222, 4
    %v224 = vadd.f32 %v222, %v223
    %v225 = vrot.slane %v224, 2
    %v226 = vadd.f32 %v224, %v225
    %v227 = vrot.slane %v226, 1
    %v228 = vadd.f32 %v226, %v227
    %v229 = vadd.f32 %v190, %v191
    %v230 = vadd.f32 %v229, %v192
    %v231 = vrot.slane %v230, 4
    %v232 = vadd.f32 %v230, %v231
    %v233 = vrot.slane %v232, 2
    %v234 = vadd.f32 %v232, %v233
    %v235 = vrot.slane %v234, 1
    %v236 = vadd.f32 %v234, %v235
    %v237 = vadd.f32 %v193, %v194
    %v238 = vadd.f32 %v237, %v195
    %v239 = vrot.slane %v238, 4
    %v240 = vadd.f32 %v238, %v239
    %v241 = vrot.slane %v240, 2
    %v242 = vadd.f32 %v240, %v241
    %v243 = vrot.slane %v242, 1
    %v244 = vadd.f32 %v242, %v243
    %v245 = vadd.f32 %v196, %v197
    %v246 = vadd.f32 %v245, %v198
    %v247 = vrot.slane %v246, 4
    %v248 = vadd.f32 %v246, %v247
    %v249 = vrot.slane %v248, 2
    %v250 = vadd.f32 %v248, %v249
    %v251 = vrot.slane %v250, 1
    %v252 = vadd.f32 %v250, %v251
    %v253 = vadd.f32 %v199, %v200
    %v254 = vadd.f32 %v253, %v201
    %v255 = vrot.slane %v254, 4
    %v256 = vadd.f32 %v254, %v255
    %v257 = vrot.slane %v256, 2
    %v258 = vadd.f32 %v256, %v257
    %v259 = vrot.slane %v258, 1
    %v260 = vadd.f32 %v258, %v259
    %v261 = vadd.f32 %v202, %v203
    %v262 = vadd.f32 %v261, %v204
    %v263 = vrot.slane %v262, 4
    %v264 = vadd.f32 %v262, %v263
    %v265 = vrot.slane %v264, 2
    %v266 = vadd.f32 %v264, %v265
    %v267 = vrot.slane %v266, 1
    %v268 = vadd.f32 %v266, %v267
    %v269 = vld [vmem:[%s1] sm:$0xff]
    %v270 = vld [vmem:[%s1 + $0x8] sm:$0xff]
    %v271 = vld [vmem:[%s1 + $0x10] sm:$0xff]
    %v272 = vld [vmem:[%s1 + $0x18] sm:$0xff]
    %v273 = vld [vmem:[%s1 + $0x20] sm:$0xff]
    %v274 = vld [vmem:[%s1 + $0x28] sm:$0xff]
    %v275 = vld [vmem:[%s1 + $0x30] sm:$0xff]
    %v276 = vld [vmem:[%s1 + $0x38] sm:$0xff]
    %v277 = vld [vmem:[%s1 + $0x40] sm:$0xff]
    %v278 = vld [vmem:[%s1 + $0x48] sm:$0xff]
    %v279 = vld [vmem:[%s1 + $0x50] sm:$0xff]
    %v280 = vld [vmem:[%s1 + $0x58] sm:$0xff]
    %v281 = vld [vmem:[%s1 + $0x60] sm:$0xff]
    %v282 = vld [vmem:[%s1 + $0x68] sm:$0xff]
    %v283 = vld [vmem:[%s1 + $0x70] sm:$0xff]
    %v284 = vld [vmem:[%s1 + $0x78] sm:$0xff]
    %v285 = vld [vmem:[%s2] sm:$0x1]
    %v287 = vlaneseq
    %v288 = vshrl.u32 %v287, 7
    %v289 = vsub.s32 0, %v288
    %v290 = vrot.slane %v285, %v289
    %vm300 = vcmask 1041409
    %v301 = vsel %vm300, %v220, %v212
    %vm302 = vcmask 1042434
    %v303 = vsel %vm302, %v228, %v301
    %vm304 = vcmask 1043459
    %v305 = vsel %vm304, %v236, %v303
    %vm306 = vcmask 1044484
    %v307 = vsel %vm306, %v244, %v305
    %vm308 = vcmask 1045509
    %v309 = vsel %vm308, %v252, %v307
    %vm310 = vcmask 1046534
    %v311 = vsel %vm310, %v260, %v309
    %vm312 = vcmask 1047559
    %v313 = vsel %vm312, %v268, %v311
    %315 = vmatprep.subr.mxu0 0.0
    %316 = vmatpush1.msra.mxu0 %v269
    %317 = vmatprep.subr.mxu0 0.0
    %318 = vmatpush1.msra.mxu0 %v270
    %319 = vmatprep.subr.mxu0 0.0
    %320 = vmatpush1.msra.mxu0 %v271
    %321 = vmatprep.subr.mxu0 0.0
    %322 = vmatpush1.msra.mxu0 %v272
    %323 = vmatprep.subr.mxu0 0.0
    %324 = vmatpush1.msra.mxu0 %v273
    %325 = vmatprep.subr.mxu0 0.0
    %326 = vmatpush1.msra.mxu0 %v274
    %327 = vmatprep.subr.mxu0 0.0
    %328 = vmatpush1.msra.mxu0 %v275
    %329 = vmatprep.subr.mxu0 0.0
    %330 = vmatpush1.msra.mxu0 %v276
    %331 = vmatprep.subr.mxu0 0.0
    %332 = vmatpush1.msra.mxu0 %v277
    %333 = vmatprep.subr.mxu0 0.0
    %334 = vmatpush1.msra.mxu0 %v278
    %335 = vmatprep.subr.mxu0 0.0
    %336 = vmatpush1.msra.mxu0 %v279
    %337 = vmatprep.subr.mxu0 0.0
    %338 = vmatpush1.msra.mxu0 %v280
    %339 = vmatprep.subr.mxu0 0.0
    %340 = vmatpush1.msra.mxu0 %v281
    %341 = vmatprep.subr.mxu0 0.0
    %342 = vmatpush1.msra.mxu0 %v282
    %343 = vmatprep.subr.mxu0 0.0
    %344 = vmatpush1.msra.mxu0 %v283
    %345 = vmatprep.subr.mxu0 0.0
    %346 = vmatpush1.msra.mxu0 %v284
    %347 = vmatprep.subr.mxu0 0.0
    %348 = vmatpush1.msra.mxu0 0.0
    %349 = vmatprep.subr.mxu0 0.0
    %350 = vmatpush1.msra.mxu0 0.0
    %351 = vmatprep.subr.mxu0 0.0
    %352 = vmatpush1.msra.mxu0 0.0
    %353 = vmatprep.subr.mxu0 0.0
    %354 = vmatpush1.msra.mxu0 0.0
    %355 = vmatprep.subr.mxu0 0.0
    %356 = vmatpush1.msra.mxu0 0.0
    %357 = vmatprep.subr.mxu0 0.0
    %358 = vmatpush1.msra.mxu0 0.0
    %359 = vmatprep.subr.mxu0 0.0
    %360 = vmatpush1.msra.mxu0 0.0
    %361 = vmatprep.subr.mxu0 0.0
    %362 = vmatpush1.msra.mxu0 0.0
    %363 = vmatprep.subr.mxu0 0.0
    %364 = vmatpush1.msra.mxu0 0.0
    %365 = vmatprep.subr.mxu0 0.0
    %366 = vmatpush1.msra.mxu0 0.0
    %367 = vmatprep.subr.mxu0 0.0
    %368 = vmatpush1.msra.mxu0 0.0
    %369 = vmatprep.subr.mxu0 0.0
    %370 = vmatpush1.msra.mxu0 0.0
    %371 = vmatprep.subr.mxu0 0.0
    %372 = vmatpush1.msra.mxu0 0.0
    %373 = vmatprep.subr.mxu0 0.0
    %374 = vmatpush1.msra.mxu0 0.0
    %375 = vmatprep.subr.mxu0 0.0
    %376 = vmatpush1.msra.mxu0 0.0
    %377 = vmatprep.subr.mxu0 0.0
    %378 = vmatpush1.msra.mxu0 0.0
    %379 = vmatprep.mubr.f32.mxu0 0.0
    %380 = vmatmul.mubr.f32.gmra.mrb[0].mxu0 %v313
    %v381 = vpop.f32.mrb[0].mxu0
    %v382 = vadd.f32 %v290, %v381
    %v383 = vpop.f32.mrb[0].mxu0
    %384 = vdwg.mxu0
    %v385 = vmax.f32 %v382, 0.0
    %v386 = vld [vmem:[#allocation2] sm:$0xff]
    %v387 = vld [vmem:[#allocation2 + $0x8] sm:$0xff]
    %v388 = vld [vmem:[#allocation2 + $0x10] sm:$0xff]
    %v389 = vld [vmem:[#allocation2 + $0x18] sm:$0xff]
    %v390 = vld [vmem:[#allocation2 + $0x20] sm:$0xff]
    %v391 = vld [vmem:[#allocation2 + $0x28] sm:$0xff]
    %v392 = vld [vmem:[#allocation2 + $0x30] sm:$0xff]
    %v393 = vld [vmem:[#allocation2 + $0x38] sm:$0xff]
    %v394 = vld [vmem:[#allocation2 + $0x40] sm:$0xff]
    %v395 = vld [vmem:[#allocation2 + $0x48] sm:$0xff]
    %v396 = vld [vmem:[#allocation2 + $0x50] sm:$0xff]
    %v397 = vld [vmem:[#allocation2 + $0x58] sm:$0xff]
    %v398 = vld [vmem:[#allocation2 + $0x60] sm:$0xff]
    %v399 = vld [vmem:[#allocation2 + $0x68] sm:$0xff]
    %v400 = vld [vmem:[#allocation2 + $0x70] sm:$0xff]
    %v401 = vld [vmem:[#allocation2 + $0x78] sm:$0xff]
    %v402 = vld [vmem:[%s4] sm:$0x1]
    %v404 = vlaneseq
    %v405 = vshrl.u32 %v404, 7
    %v406 = vsub.s32 0, %v405
    %v407 = vrot.slane %v402, %v406
    %409 = vmatprep.subr.mxu0 0.0
    %410 = vmatpush1.msra.mxu0 %v386
    %411 = vmatprep.subr.mxu0 0.0
    %412 = vmatpush1.msra.mxu0 %v387
    %413 = vmatprep.subr.mxu0 0.0
    %414 = vmatpush1.msra.mxu0 %v388
    %415 = vmatprep.subr.mxu0 0.0
    %416 = vmatpush1.msra.mxu0 %v389
    %417 = vmatprep.subr.mxu0 0.0
    %418 = vmatpush1.msra.mxu0 %v390
    %419 = vmatprep.subr.mxu0 0.0
    %420 = vmatpush1.msra.mxu0 %v391
    %421 = vmatprep.subr.mxu0 0.0
    %422 = vmatpush1.msra.mxu0 %v392
    %423 = vmatprep.subr.mxu0 0.0
    %424 = vmatpush1.msra.mxu0 %v393
    %425 = vmatprep.subr.mxu0 0.0
    %426 = vmatpush1.msra.mxu0 %v394
    %427 = vmatprep.subr.mxu0 0.0
    %428 = vmatpush1.msra.mxu0 %v395
    %429 = vmatprep.subr.mxu0 0.0
    %430 = vmatpush1.msra.mxu0 %v396
    %431 = vmatprep.subr.mxu0 0.0
    %432 = vmatpush1.msra.mxu0 %v397
    %433 = vmatprep.subr.mxu0 0.0
    %434 = vmatpush1.msra.mxu0 %v398
    %435 = vmatprep.subr.mxu0 0.0
    %436 = vmatpush1.msra.mxu0 %v399
    %437 = vmatprep.subr.mxu0 0.0
    %438 = vmatpush1.msra.mxu0 %v400
    %439 = vmatprep.subr.mxu0 0.0
    %440 = vmatpush1.msra.mxu0 %v401
    %441 = vmatprep.subr.mxu0 0.0
    %442 = vmatpush1.msra.mxu0 0.0
    %443 = vmatprep.subr.mxu0 0.0
    %444 = vmatpush1.msra.mxu0 0.0
    %445 = vmatprep.subr.mxu0 0.0
    %446 = vmatpush1.msra.mxu0 0.0
    %447 = vmatprep.subr.mxu0 0.0
    %448 = vmatpush1.msra.mxu0 0.0
    %449 = vmatprep.subr.mxu0 0.0
    %450 = vmatpush1.msra.mxu0 0.0
    %451 = vmatprep.subr.mxu0 0.0
    %452 = vmatpush1.msra.mxu0 0.0
    %453 = vmatprep.subr.mxu0 0.0
    %454 = vmatpush1.msra.mxu0 0.0
    %455 = vmatprep.subr.mxu0 0.0
    %456 = vmatpush1.msra.mxu0 0.0
    %457 = vmatprep.subr.mxu0 0.0
    %458 = vmatpush1.msra.mxu0 0.0
    %459 = vmatprep.subr.mxu0 0.0
    %460 = vmatpush1.msra.mxu0 0.0
    %461 = vmatprep.subr.mxu0 0.0
    %462 = vmatpush1.msra.mxu0 0.0
    %463 = vmatprep.subr.mxu0 0.0
    %464 = vmatpush1.msra.mxu0 0.0
    %465 = vmatprep.subr.mxu0 0.0
    %466 = vmatpush1.msra.mxu0 0.0
    %467 = vmatprep.subr.mxu0 0.0
    %468 = vmatpush1.msra.mxu0 0.0
    %469 = vmatprep.subr.mxu0 0.0
    %470 = vmatpush1.msra.mxu0 0.0
    %471 = vmatprep.subr.mxu0 0.0
    %472 = vmatpush1.msra.mxu0 0.0
    %473 = vmatprep.mubr.f32.mxu0 0.0
    %474 = vmatmul.mubr.f32.gmra.mrb[0].mxu0 %v385
    %v475 = vpop.f32.mrb[0].mxu0
    %v476 = vadd.f32 %v407, %v475
    %v477 = vpop.f32.mrb[0].mxu0
    %478 = vdwg.mxu0
    %479 = vst [vmem:[#allocation5] sm:$0xff] %v476
    // Predicated region
    $region26: #{tpu_custom_call.1} parent=1 // pred_check
      _
    $region27: #{tpu_custom_call.1} parent=1 // pred_check_branch
      %481 = sbr.rel (0) target = $region29
    $region28: #{tpu_custom_call.1} parent=1 // pred_region
      %s483 = ssub.s32 128, 128
      %484 = vsyncadd [#allocation4], %s483
      %s486 = sshll.u32 [#allocation5], 4
      %s487 = int_to_ptr.vmem [resolvable:$true] %s486
      %489 = dma.vmem_to_hbm [thread:$0]  %s487, 128, %s5, [#allocation4]
    $region29: #{tpu_custom_call.1} parent=1 // pred_fallthru
      _
    // Predicated region
    $region30: #{tpu_custom_call.1} parent=1 // pred_check
      _
    $region31: #{tpu_custom_call.1} parent=1 // pred_check_branch
      %491 = sbr.rel (0) target = $region33
    $region32: #{tpu_custom_call.1} parent=1 // pred_region
      %492 = dma.done [#allocation4], 128
    $region33: #{tpu_custom_call.1} parent=1 // pred_fallthru
      _
    %493 = vsyncpa [#allocation3], 1
    %494 = vsyncpa [#allocation4], 1

</llo_original>
